<compile_context>
chip_gen: v7x
topology: tpu7x:2x2x1
jax: 0.10.0
libtpu: 0.0.40
codegen_flags: <defaults>
</compile_context>

<pallas_src>
import functools

import jax
import jax.numpy as jnp
from jax.experimental import pallas as pl
from jax.experimental.pallas import tpu as pltpu

_LANE = 128
_VMEM_CAP = 32 * 1024 * 1024      # safe on v7x (64 MiB physical per TC)
_VMEM_FLOOR = 16 * 1024 * 1024


def _layernorm_nct_kernel(x_ref, g_ref, b_ref, o_ref, *, eps, inv_c,
                          apply_in_out_dtype):
    # x_ref: (nb, C, tT) -- channels on sublanes, time on lanes.
    x = x_ref[...].astype(jnp.float32)
    # Two-pass moments in f32 (numerically matches F.layer_norm).
    mean = jnp.sum(x, axis=1, keepdims=True) * inv_c        # (nb, 1, tT)
    xc = x - mean
    var = jnp.sum(xc * xc, axis=1, keepdims=True) * inv_c   # (nb, 1, tT)
    inv_std = jax.lax.rsqrt(var + eps)                      # (nb, 1, tT)
    if apply_in_out_dtype:
        # bf16 apply pass (moments stayed in f32): halves intermediate pressure.
        xn = (xc * inv_std).astype(o_ref.dtype)
        g = g_ref[...].astype(o_ref.dtype)                  # (1, C, 1)
        b = b_ref[...].astype(o_ref.dtype)
        o_ref[...] = xn * g + b
    else:
        g = g_ref[...].astype(jnp.float32)
        b = b_ref[...].astype(jnp.float32)
        o_ref[...] = (xc * inv_std * g + b).astype(o_ref.dtype)


def _block_vmem_estimate(nb, C, tt, itemsize):
    blk = nb * C * tt
    # 2x double-buffered input + output blocks in x dtype, ~3 f32 upcast
    # temporaries, plus slack for gamma/beta and Mosaic internal scratch.
    return 4 * blk * itemsize + 3 * blk * 4 + (1 << 20)


def _choose_tiling(B, C, T, itemsize, max_block_bytes, min_total_steps):
    bytes_per_col = C * itemsize
    max_tt = (max_block_bytes // max(bytes_per_col, 1)) // _LANE * _LANE
    # Floor: keep DMA rows long (>= 512 lanes) even if a very large C would
    # otherwise push the budgeted tile down to 128-256 lanes.
    if T >= 4 * _LANE:
        max_tt = max(max_tt, 4 * _LANE)
    max_tt = max(max_tt, _LANE)

    if T <= max_tt:
        # Full T fits in one lane tile (full-dim blocks are exempt from the
        # (8,128) rule).  Fold batches so each grid step moves more bytes.
        tt = T
        per_batch = max(C * T * itemsize, 1)
        nb = max(1, min(B, max_block_bytes // per_batch))
        num_t = 1
        num_b = pl.cdiv(B, nb)
    else:
        nb = 1
        tt = max_tt
        num_t = pl.cdiv(T, tt)
        num_b = B
        # v7x: shrink tT so both TensorCores get several pipelined steps.
        while num_b * num_t < min_total_steps and tt > _LANE:
            tt = max(_LANE, (tt // 2) // _LANE * _LANE)
            num_t = pl.cdiv(T, tt)

    # Keep the estimated VMEM footprint under the v7x-safe cap.
    while _block_vmem_estimate(nb, C, tt, itemsize) > _VMEM_CAP and nb > 1:
        nb = max(1, nb // 2)
        num_b = pl.cdiv(B, nb)
    while _block_vmem_estimate(nb, C, tt, itemsize) > _VMEM_CAP and tt > _LANE:
        tt = max(_LANE, (tt // 2) // _LANE * _LANE)
        num_t = pl.cdiv(T, tt)

    return nb, num_b, tt, num_t


def layer_norm_nct(x, gamma, beta, eps=1e-5, *,
                   max_block_bytes=4 * 1024 * 1024, min_total_steps=8):
    """LayerNorm over the channel dim of an NCT (B, C, T) tensor.

    Equivalent to: x.transpose(1,-1) -> F.layer_norm(..., (C,), gamma, beta, eps)
    -> transpose back, but computed directly in NCT layout (no transposes).
    """
    B, C, T = x.shape
    itemsize = jnp.dtype(x.dtype).itemsize

    nb, num_b, tt, num_t = _choose_tiling(
        B, C, T, itemsize, max_block_bytes, min_total_steps)

    vmem_limit = int(min(_VMEM_CAP,
                         max(_VMEM_FLOOR, _block_vmem_estimate(nb, C, tt, itemsize))))

    apply_in_out_dtype = (x.dtype == jnp.bfloat16)

    out = pl.pallas_call(
        functools.partial(_layernorm_nct_kernel, eps=eps, inv_c=1.0 / C,
                          apply_in_out_dtype=apply_in_out_dtype),
        out_shape=jax.ShapeDtypeStruct((B, C, T), x.dtype),
        grid_spec=pltpu.PrefetchScalarGridSpec(
            num_scalar_prefetch=0,
            grid=(num_b, num_t),
            in_specs=[
                pl.BlockSpec((nb, C, tt), lambda b, t: (b, 0, t)),
                pl.BlockSpec((1, C, 1), lambda b, t: (0, 0, 0)),
                pl.BlockSpec((1, C, 1), lambda b, t: (0, 0, 0)),
            ],
            out_specs=pl.BlockSpec((nb, C, tt), lambda b, t: (b, 0, t)),
        ),
        compiler_params=pltpu.CompilerParams(
            dimension_semantics=("parallel", "parallel"),
            vmem_limit_bytes=vmem_limit,
        ),
    )(x, gamma.reshape(1, C, 1), beta.reshape(1, C, 1))
    return out


def _reference_layer_norm_nct(x, gamma, beta, eps=1e-5):
    xt = jnp.transpose(x, (0, 2, 1)).astype(jnp.float32)
    mean = jnp.mean(xt, axis=-1, keepdims=True)
    var = jnp.mean((xt - mean) ** 2, axis=-1, keepdims=True)
    y = (xt - mean) * jax.lax.rsqrt(var + eps)
    y = y * gamma.astype(jnp.float32) + beta.astype(jnp.float32)
    return jnp.transpose(y, (0, 2, 1)).astype(x.dtype)


if __name__ == "__main__":
    key = jax.random.PRNGKey(0)

    # Small shape consistent with the module (B, C, T).
    B, C, T = 2, 4, 16
    x = jax.random.normal(key, (B, C, T), dtype=jnp.float32)
    gamma = jnp.ones((C,), dtype=jnp.float32)   # matches torch.ones(channels)
    beta = jnp.zeros((C,), dtype=jnp.float32)   # matches torch.zeros(channels)

    out = jax.block_until_ready(layer_norm_nct(x, gamma, beta, eps=1e-5))
    ref = _reference_layer_norm_nct(x, gamma, beta, eps=1e-5)
    assert out.shape == (B, C, T)
    assert jnp.allclose(out, ref, atol=1e-5, rtol=1e-5)

    # Tiled / ragged-T path: tiny block budget -> tt = 128, cdiv grid covers T=200.
    B2, C2, T2 = 2, 8, 200
    x2 = jax.random.normal(jax.random.PRNGKey(1), (B2, C2, T2), dtype=jnp.float32)
    g2 = 1.0 + 0.1 * jax.random.normal(jax.random.PRNGKey(2), (C2,), dtype=jnp.float32)
    b2 = 0.1 * jax.random.normal(jax.random.PRNGKey(3), (C2,), dtype=jnp.float32)
    out2 = jax.block_until_ready(
        layer_norm_nct(x2, g2, b2, eps=1e-5, max_block_bytes=4096))
    ref2 = _reference_layer_norm_nct(x2, g2, b2, eps=1e-5)
    assert jnp.allclose(out2, ref2, atol=1e-5, rtol=1e-5)

    # bf16 path: f32 moments, bf16 apply, dtype-aware tiling + batch fold.
    B3, C3, T3 = 2, 8, 256
    x3 = jax.random.normal(jax.random.PRNGKey(4), (B3, C3, T3), dtype=jnp.float32)
    x3 = x3.astype(jnp.bfloat16)
    g3 = 1.0 + 0.1 * jax.random.normal(jax.random.PRNGKey(5), (C3,), dtype=jnp.float32)
    b3 = 0.1 * jax.random.normal(jax.random.PRNGKey(6), (C3,), dtype=jnp.float32)
    out3 = jax.block_until_ready(layer_norm_nct(x3, g3, b3, eps=1e-5))
    ref3 = _reference_layer_norm_nct(x3, g3, b3, eps=1e-5)
    assert jnp.allclose(out3.astype(jnp.float32), ref3.astype(jnp.float32),
                        atol=5e-2, rtol=5e-2)

    print("KERNEL_OK")
</pallas_src>

<mosaic_0001>
module attributes {stable_mosaic.version = 11 : i64} {
  func.func @_layernorm_nct_kernel(%arg0: i32, %arg1: i32, %arg2: memref<2x4x16xf32, #tpu.memory_space<vmem>>, %arg3: memref<1x4x1xf32, #tpu.memory_space<vmem>>, %arg4: memref<1x4x1xf32, #tpu.memory_space<vmem>>, %arg5: memref<2x4x16xf32, #tpu.memory_space<vmem>>) attributes {dimension_semantics = [#tpu.dimension_semantics<parallel>, #tpu.dimension_semantics<parallel>], iteration_bounds = array<i64: 1, 1>, scalar_prefetch = 0 : i64, scratch_operands = 0 : i64, tpu.core_type = #tpu.core_type<tc>, window_params = [{transform_indices = @transform_0, window_bounds = array<i64: 2, 4, 16>}, {pipeline_mode = #tpu.pipeline_mode<synchronous>, transform_indices = @transform_1, window_bounds = array<i64: 1, 4, 1>}, {pipeline_mode = #tpu.pipeline_mode<synchronous>, transform_indices = @transform_2, window_bounds = array<i64: 1, 4, 1>}, {transform_indices = @transform_3, window_bounds = array<i64: 2, 4, 16>}]} {
    %c0 = arith.constant 0 : index
    %c0_0 = arith.constant 0 : index
    %c0_1 = arith.constant 0 : index
    %0 = vector.load %arg2[%c0, %c0_0, %c0_1] : memref<2x4x16xf32, #tpu.memory_space<vmem>>, vector<2x4x16xf32>
    %cst = arith.constant dense<0.000000e+00> : vector<2x16xf32>
    %1 = vector.multi_reduction <add>, %0, %cst [1] : vector<2x4x16xf32> to vector<2x16xf32>
    %2 = vector.shape_cast %1 : vector<2x16xf32> to vector<2x1x16xf32>
    %cst_2 = arith.constant 2.500000e-01 : f32
    %3 = vector.broadcast %cst_2 : f32 to vector<2x1x16xf32>
    %4 = arith.mulf %2, %3 : vector<2x1x16xf32>
    %5 = vector.broadcast %4 : vector<2x1x16xf32> to vector<2x4x16xf32>
    %6 = arith.subf %0, %5 : vector<2x4x16xf32>
    %7 = arith.mulf %6, %6 : vector<2x4x16xf32>
    %cst_3 = arith.constant dense<0.000000e+00> : vector<2x16xf32>
    %8 = vector.multi_reduction <add>, %7, %cst_3 [1] : vector<2x4x16xf32> to vector<2x16xf32>
    %9 = vector.shape_cast %8 : vector<2x16xf32> to vector<2x1x16xf32>
    %cst_4 = arith.constant 2.500000e-01 : f32
    %10 = vector.broadcast %cst_4 : f32 to vector<2x1x16xf32>
    %11 = arith.mulf %9, %10 : vector<2x1x16xf32>
    %cst_5 = arith.constant 9.99999974E-6 : f32
    %12 = vector.broadcast %cst_5 : f32 to vector<2x1x16xf32>
    %13 = arith.addf %11, %12 : vector<2x1x16xf32>
    %14 = math.rsqrt %13 : vector<2x1x16xf32>
    %c0_6 = arith.constant 0 : index
    %c0_7 = arith.constant 0 : index
    %c0_8 = arith.constant 0 : index
    %15 = vector.load %arg3[%c0_6, %c0_7, %c0_8] : memref<1x4x1xf32, #tpu.memory_space<vmem>>, vector<1x4x1xf32>
    %c0_9 = arith.constant 0 : index
    %c0_10 = arith.constant 0 : index
    %c0_11 = arith.constant 0 : index
    %16 = vector.load %arg4[%c0_9, %c0_10, %c0_11] : memref<1x4x1xf32, #tpu.memory_space<vmem>>, vector<1x4x1xf32>
    %17 = vector.broadcast %14 : vector<2x1x16xf32> to vector<2x4x16xf32>
    %18 = arith.mulf %6, %17 : vector<2x4x16xf32>
    %19 = vector.broadcast %15 : vector<1x4x1xf32> to vector<2x4x16xf32>
    %20 = arith.mulf %18, %19 : vector<2x4x16xf32>
    %21 = vector.broadcast %16 : vector<1x4x1xf32> to vector<2x4x16xf32>
    %22 = arith.addf %20, %21 : vector<2x4x16xf32>
    %c0_12 = arith.constant 0 : index
    %c0_13 = arith.constant 0 : index
    %c0_14 = arith.constant 0 : index
    %23 = vector.load %arg5[%c0_12, %c0_13, %c0_14] : memref<2x4x16xf32, #tpu.memory_space<vmem>>, vector<2x4x16xf32>
    tpu.vector_store %arg5[%c0_12, %c0_13, %c0_14], %22 {strides = array<i32>} : memref<2x4x16xf32, #tpu.memory_space<vmem>>, vector<2x4x16xf32>,
    return
  }
  func.func @transform_0(%arg0: i32, %arg1: i32) -> (i32, i32, i32) {
    %c0_i32 = arith.constant 0 : i32
    %c0_i32_0 = arith.constant 0 : i32
    return %arg0, %c0_i32, %arg1 : i32, i32, i32
  }
  func.func @transform_1(%arg0: i32, %arg1: i32) -> (i32, i32, i32) {
    %c0_i32 = arith.constant 0 : i32
    %c0_i32_0 = arith.constant 0 : i32
    %c0_i32_1 = arith.constant 0 : i32
    %c0_i32_2 = arith.constant 0 : i32
    return %c0_i32, %c0_i32_0, %c0_i32_1 : i32, i32, i32
  }
  func.func @transform_2(%arg0: i32, %arg1: i32) -> (i32, i32, i32) {
    %c0_i32 = arith.constant 0 : i32
    %c0_i32_0 = arith.constant 0 : i32
    %c0_i32_1 = arith.constant 0 : i32
    %c0_i32_2 = arith.constant 0 : i32
    return %c0_i32, %c0_i32_0, %c0_i32_1 : i32, i32, i32
  }
  func.func @transform_3(%arg0: i32, %arg1: i32) -> (i32, i32, i32) {
    %c0_i32 = arith.constant 0 : i32
    %c0_i32_0 = arith.constant 0 : i32
    return %arg0, %c0_i32, %arg1 : i32, i32, i32
  }
}

</mosaic_0001>

<llo_original>
// kernel: tpu_custom_call.1
$region0: #{tpu_custom_call.1}
  #allocation0 [shape = 'u32[]', space=smem, size = 0x4, offset = 0x4, fixed_abs, tag = 'smem constant byte address 0x4 - core index']
  #allocation1 [shape = 'u32[144,128]{1,0:T(1,128)}', space=vmem, size = 0x12000, scoped, tag = 'internal scratch']
  %s0 = inlined_call_operand.vmem [shape: f32[2,4,16], index: 0, kind: input, shape index: {}]
  %s1 = inlined_call_operand.vmem [shape: f32[1,4,1], index: 1, kind: input, shape index: {}]
  %s2 = inlined_call_operand.vmem [shape: f32[1,4,1], index: 2, kind: input, shape index: {}]
  %s3 = inlined_call_operand.hbm [shape: f32[2,4,16], index: 3, kind: output, shape index: {}]
  %s4 = sld [smem:[#allocation0]]
  $region22: #{tpu_custom_call.1} parent=0
    _
  %s6 = ssub.s32 1, %s4
  %s7 = scalar_select 0, %s6, %s4
  $region1: #{tpu_custom_call.1} parent=0
    #allocation2 [shape = 'u8[4096]{0}', space=vmem, size = 0x1000, scoped, tag = 'output window, operand 0, single buffered']
    #allocation3 [shape = 's32[1]{0}', space=sflag, size = 0x4, scoped, tag = 'scoped memory for tpu_custom_call.1']
    %8 = vsyncpa [#allocation3], 0
    // Predicated region
    $region2: #{tpu_custom_call.1} parent=1 // pred_check
      _
    $region3: #{tpu_custom_call.1} parent=1 // pred_check_branch
      %10 = sbr.rel (0) target = $region5
    $region4: #{tpu_custom_call.1} parent=1 // pred_region
      _
    $region5: #{tpu_custom_call.1} parent=1 // pred_fallthru
      _
    // Predicated region
    $region6: #{tpu_custom_call.1} parent=1 // pred_check
      _
    $region7: #{tpu_custom_call.1} parent=1 // pred_check_branch
      %12 = sbr.rel (0) target = $region9
    $region8: #{tpu_custom_call.1} parent=1 // pred_region
      _
    $region9: #{tpu_custom_call.1} parent=1 // pred_fallthru
      _
    // Predicated region
    $region10: #{tpu_custom_call.1} parent=1 // pred_check
      _
    $region11: #{tpu_custom_call.1} parent=1 // pred_check_branch
      %14 = sbr.rel (0) target = $region13
    $region12: #{tpu_custom_call.1} parent=1 // pred_region
      _
    $region13: #{tpu_custom_call.1} parent=1 // pred_fallthru
      _
    %v15 = vld [vmem:[%s0] sm:$0xf]
    %v16 = vld [vmem:[%s0 + $0x4] sm:$0xf]
    %vm17 = vcmask 125952
    %v18 = vsel %vm17, %v15, 0.0
    %v19 = vrot.slane %v18, 4
    %v20 = vadd.f32 %v18, %v19
    %v21 = vrot.slane %v20, 2
    %v22 = vadd.f32 %v20, %v21
    %v23 = vrot.slane %v22, 1
    %v24 = vadd.f32 %v22, %v23
    %v25 = vsel %vm17, %v16, 0.0
    %v26 = vrot.slane %v25, 4
    %v27 = vadd.f32 %v25, %v26
    %v28 = vrot.slane %v27, 2
    %v29 = vadd.f32 %v27, %v28
    %v30 = vrot.slane %v29, 1
    %v31 = vadd.f32 %v29, %v30
    %v32 = vmul.f32 %v24, 0.25
    %v33 = vmul.f32 %v31, 0.25
    %v34 = vsub.f32 %v15, %v32
    %v35 = vsub.f32 %v16, %v33
    %v36 = vmul.f32 %v34, %v34
    %v37 = vmul.f32 %v35, %v35
    %v38 = vsel %vm17, %v36, 0.0
    %v39 = vrot.slane %v38, 4
    %v40 = vadd.f32 %v38, %v39
    %v41 = vrot.slane %v40, 2
    %v42 = vadd.f32 %v40, %v41
    %v43 = vrot.slane %v42, 1
    %v44 = vadd.f32 %v42, %v43
    %v45 = vsel %vm17, %v37, 0.0
    %v46 = vrot.slane %v45, 4
    %v47 = vadd.f32 %v45, %v46
    %v48 = vrot.slane %v47, 2
    %v49 = vadd.f32 %v47, %v48
    %v50 = vrot.slane %v49, 1
    %v51 = vadd.f32 %v49, %v50
    %v52 = vmul.f32 %v44, 0.25
    %v53 = vmul.f32 %v51, 0.25
    %v54 = vadd.f32 %v52, 1e-05
    %v55 = vadd.f32 %v53, 1e-05
    %v56 = vrsqrt.pop %v54
    %v57 = vrsqrt.pop %v55
    %v58 = vld [vmem:[%s1] sm:$0xf]
    %v59 = vld [vmem:[%s2] sm:$0xf]
    %v60 = vmul.f32 %v34, %v56
    %v61 = vmul.f32 %v35, %v57
    %63 = vset.pattern.permute.xlu0 0
    %64 = vperm.xlu0 %63, %v58
    %v65 = vpop.permute.xlu0 %64
    %v67 = vmul.f32 %v60, %v65
    %v68 = vmul.f32 %v61, %v65
    %70 = vset.pattern.permute.xlu0 0
    %71 = vperm.xlu0 %70, %v59
    %v72 = vpop.permute.xlu0 %71
    %v74 = vadd.f32 %v67, %v72
    %v75 = vadd.f32 %v68, %v72
    %76 = vst.msk [vmem:[#allocation2] sm:$0xf] %vm17, %v74
    %77 = vst.msk [vmem:[#allocation2 + $0x4] sm:$0xf] %vm17, %v75
    // Predicated region
    $region14: #{tpu_custom_call.1} parent=1 // pred_check
      _
    $region15: #{tpu_custom_call.1} parent=1 // pred_check_branch
      %79 = sbr.rel (0) target = $region17
    $region16: #{tpu_custom_call.1} parent=1 // pred_region
      %s81 = ssub.s32 128, 128
      %82 = vsyncadd [#allocation3], %s81
      %s83 = sshll.u32 [#allocation2], 4
      %s84 = int_to_ptr.vmem [resolvable:$true] %s83
      %89 = dma.vmem_to_hbm [thread:$0]  %s84, 128, %s3, [#allocation3], 64, 64, 4
    $region17: #{tpu_custom_call.1} parent=1 // pred_fallthru
      _
    // Predicated region
    $region18: #{tpu_custom_call.1} parent=1 // pred_check
      _
    $region19: #{tpu_custom_call.1} parent=1 // pred_check_branch
      %91 = sbr.rel (0) target = $region21
    $region20: #{tpu_custom_call.1} parent=1 // pred_region
      %92 = dma.done [#allocation3], 128
    $region21: #{tpu_custom_call.1} parent=1 // pred_fallthru
      _
    %93 = vsyncpa [#allocation3], 1

</llo_original>
